<compile_context>
chip_gen: v5e
topology: v5e:2x2
jax: 0.10.0
libtpu: 0.0.40
codegen_flags: <defaults>
</compile_context>

<pallas_src>
import jax
import jax.numpy as jnp
from jax.experimental import pallas as pl
from jax.experimental.pallas import tpu as pltpu


def _round_up(n, m):
    return ((n + m - 1) // m) * m


def _mlp_kernel(x_ref, w1_ref, b1_ref, w2_ref, b2_ref, o_ref):
    # Cast the f32 x tile to bf16 on the VPU (free, co-issues) for the MXU.
    x_bf = x_ref[...].astype(jnp.bfloat16)
    # Hidden layer on the MXU: (TB, 576) bf16 @ (576, Hp) bf16 -> f32 accum.
    h = jnp.dot(x_bf, w1_ref[...], preferred_element_type=jnp.float32)
    h = jax.nn.sigmoid(h + b1_ref[...])                    # f32 VPU add + EUP sigmoid
    # Output layer: N=1 matmul as VPU multiply + cross-lane (XLU) reduce.
    # Padded hidden lanes contribute 0 because the padded w2 entries are 0.
    y = jnp.sum(h * w2_ref[...], axis=-1, keepdims=True) + b2_ref[...]
    o_ref[...] = jax.nn.sigmoid(y).astype(o_ref.dtype)


def fully_connected_network(x, w1, b1, w2, b2, *, block_b=2048):
    """Forward pass: sigmoid(sigmoid(flatten(x) @ w1 + b1) @ w2 + b2).

    Args:
      x:  (B, 1, 24, 24) float32 (NCHW, like PyTorch).
      w1: (576, H) float32  (torch weight transposed to in x out)
      b1: (H,)     float32
      w2: (H, 1)   float32
      b2: (1,)     float32
    Returns:
      (B, 1) float32
    """
    B = x.shape[0]
    in_feats = 24 * 24
    hidden = w1.shape[1]

    # ---------------- layout prep (pure glue, no compute hoisting) ------------
    # Lane-dense hidden dim (minimum one lane tile; do not widen further).
    h_pad = _round_up(max(hidden, 1), 128)
    # Batch tile: either the whole (small) batch, or a multiple of 8 so the
    # (8,128) sublane rule holds.  No batch padding — the grid uses cdiv and
    # the final block is a ragged tail whose out-of-range rows are masked.
    if B <= block_b:
        tb = B
    else:
        tb = _round_up(block_b, 8)

    x_flat = x.reshape(B, in_feats).astype(jnp.float32)          # view-only glue
    w1_bf16 = jnp.pad(w1.astype(jnp.float32),
                      ((0, 0), (0, h_pad - hidden))).astype(jnp.bfloat16)  # tiny, resident
    b1_p = jnp.pad(b1.astype(jnp.float32), (0, h_pad - hidden)).reshape(1, h_pad)
    w2_row = jnp.pad(w2.astype(jnp.float32).reshape(1, hidden),
                     ((0, 0), (0, h_pad - hidden)))              # zeros in pad
    b2_2d = b2.reshape(1, 1).astype(jnp.float32)

    grid = (pl.cdiv(B, tb),)
    flops = 2 * B * in_feats * h_pad + 4 * B * h_pad
    bytes_accessed = (B * in_feats * 4              # x (f32, streamed)
                      + in_feats * h_pad * 2        # w1 (bf16, one-time)
                      + 2 * h_pad * 4 + 4           # b1, w2, b2
                      + B * 4)                      # output

    out = pl.pallas_call(
        _mlp_kernel,
        out_shape=jax.ShapeDtypeStruct((B, 1), jnp.float32),
        grid_spec=pltpu.PrefetchScalarGridSpec(
            num_scalar_prefetch=0,
            grid=grid,
            in_specs=[
                pl.BlockSpec((tb, in_feats), lambda i: (i, 0)),     # streamed x tile
                pl.BlockSpec((in_feats, h_pad), lambda i: (0, 0)),  # VMEM-resident
                pl.BlockSpec((1, h_pad), lambda i: (0, 0)),
                pl.BlockSpec((1, h_pad), lambda i: (0, 0)),
                pl.BlockSpec((1, 1), lambda i: (0, 0)),
            ],
            out_specs=pl.BlockSpec((tb, 1), lambda i: (i, 0)),
        ),
        compiler_params=pltpu.CompilerParams(
            dimension_semantics=("parallel",),       # megacore: split batch grid
            vmem_limit_bytes=32 << 20,               # safe on v5e/v6e/v7x
        ),
        cost_estimate=pl.CostEstimate(
            flops=int(flops),
            transcendentals=int(B * (h_pad + 1)),
            bytes_accessed=int(bytes_accessed),
        ),
    )(x_flat, w1_bf16, b1_p, w2_row, b2_2d)

    return out


def init_params(key, hidden_nodes=5):
    """Init mirroring torch.nn.Linear default (U[-1/sqrt(fan_in), 1/sqrt(fan_in)])."""
    in_feats = 24 * 24
    k1, k2, k3, k4 = jax.random.split(key, 4)
    bound1 = 1.0 / jnp.sqrt(in_feats)
    bound2 = 1.0 / jnp.sqrt(hidden_nodes)
    # Stored directly as (in, out) — i.e. torch weight transposed.
    w1 = jax.random.uniform(k1, (in_feats, hidden_nodes), jnp.float32, -bound1, bound1)
    b1 = jax.random.uniform(k2, (hidden_nodes,), jnp.float32, -bound1, bound1)
    w2 = jax.random.uniform(k3, (hidden_nodes, 1), jnp.float32, -bound2, bound2)
    b2 = jax.random.uniform(k4, (1,), jnp.float32, -bound2, bound2)
    return w1, b1, w2, b2


if __name__ == "__main__":
    key = jax.random.PRNGKey(0)
    k_x, k_p = jax.random.split(key)

    batch = 2
    hidden_nodes = 5
    x = jax.random.normal(k_x, (batch, 1, 24, 24), dtype=jnp.float32)  # NCHW
    w1, b1, w2, b2 = init_params(k_p, hidden_nodes)

    out = jax.block_until_ready(fully_connected_network(x, w1, b1, w2, b2))
    assert out.shape == (batch, 1)

    x_flat = x.reshape(batch, -1)

    # Reference along the same bf16-matmul / f32-reduce path as the kernel.
    h_bf = jnp.dot(x_flat.astype(jnp.bfloat16), w1.astype(jnp.bfloat16),
                   preferred_element_type=jnp.float32)
    h_bf = jax.nn.sigmoid(h_bf + b1)
    ref_bf = jax.nn.sigmoid(
        jnp.sum(h_bf * w2.reshape(1, -1), axis=-1, keepdims=True) + b2)

    # Pure f32 reference (exact PyTorch module semantics).
    # TODO(synk): bf16 MXU inputs deviate from torch's f32 matmul at ~5e-3;
    # use an f32 (or bf16x3) matmul path if bit-level parity is required.
    ref_f32 = jax.nn.sigmoid(jax.nn.sigmoid(x_flat @ w1 + b1) @ w2 + b2)

    assert jnp.allclose(out, ref_bf, atol=1e-4, rtol=1e-4)
    assert jnp.allclose(out, ref_f32, atol=5e-3, rtol=5e-3)

    print("KERNEL_OK")
</pallas_src>

<mosaic_0001>
module attributes {stable_mosaic.version = 11 : i64} {
  func.func @_mlp_kernel(%arg0: i32, %arg1: memref<2x576xf32, #tpu.memory_space<vmem>>, %arg2: memref<576x128xbf16, #tpu.memory_space<vmem>>, %arg3: memref<1x128xf32, #tpu.memory_space<vmem>>, %arg4: memref<1x128xf32, #tpu.memory_space<vmem>>, %arg5: memref<1x1xf32, #tpu.memory_space<vmem>>, %arg6: memref<2x1xf32, #tpu.memory_space<vmem>>) attributes {dimension_semantics = [#tpu.dimension_semantics<parallel>], iteration_bounds = array<i64: 1>, scalar_prefetch = 0 : i64, scratch_operands = 0 : i64, tpu.core_type = #tpu.core_type<tc>, window_params = [{transform_indices = @transform_0, window_bounds = array<i64: 2, 576>}, {pipeline_mode = #tpu.pipeline_mode<synchronous>, transform_indices = @transform_1, window_bounds = array<i64: 576, 128>}, {pipeline_mode = #tpu.pipeline_mode<synchronous>, transform_indices = @transform_2, window_bounds = array<i64: 1, 128>}, {pipeline_mode = #tpu.pipeline_mode<synchronous>, transform_indices = @transform_3, window_bounds = array<i64: 1, 128>}, {pipeline_mode = #tpu.pipeline_mode<synchronous>, transform_indices = @transform_4, window_bounds = array<i64: 1, 1>}, {transform_indices = @transform_5, window_bounds = array<i64: 2, 1>}]} {
    %c0 = arith.constant 0 : index
    %c0_0 = arith.constant 0 : index
    %0 = vector.load %arg1[%c0, %c0_0] : memref<2x576xf32, #tpu.memory_space<vmem>>, vector<2x576xf32>
    %1 = arith.truncf %0 : vector<2x576xf32> to vector<2x576xbf16>
    %c0_1 = arith.constant 0 : index
    %c0_2 = arith.constant 0 : index
    %2 = vector.load %arg2[%c0_1, %c0_2] : memref<576x128xbf16, #tpu.memory_space<vmem>>, vector<576x128xbf16>
    %cst = arith.constant dense<0.000000e+00> : vector<2x128xf32>
    %3 = tpu.matmul %1, %2, %cst {dimension_numbers = #tpu.dot_dimension_numbers<[1], [0], [0], [1], [0, 0, 1, 1], [], []>} : vector<2x576xbf16>, vector<576x128xbf16>, vector<2x128xf32> -> vector<2x128xf32>
    %c0_3 = arith.constant 0 : index
    %c0_4 = arith.constant 0 : index
    %4 = vector.load %arg3[%c0_3, %c0_4] : memref<1x128xf32, #tpu.memory_space<vmem>>, vector<1x128xf32>
    %5 = vector.broadcast %4 : vector<1x128xf32> to vector<2x128xf32>
    %6 = arith.addf %3, %5 : vector<2x128xf32>
    %7 = arith.negf %6 : vector<2x128xf32>
    %8 = math.exp %7 : vector<2x128xf32>
    %cst_5 = arith.constant 1.000000e+00 : f32
    %9 = vector.broadcast %cst_5 : f32 to vector<2x128xf32>
    %10 = arith.addf %9, %8 : vector<2x128xf32>
    %11 = arith.divf %9, %10 : vector<2x128xf32>
    %c0_6 = arith.constant 0 : index
    %c0_7 = arith.constant 0 : index
    %12 = vector.load %arg4[%c0_6, %c0_7] : memref<1x128xf32, #tpu.memory_space<vmem>>, vector<1x128xf32>
    %13 = vector.broadcast %12 : vector<1x128xf32> to vector<2x128xf32>
    %14 = arith.mulf %11, %13 : vector<2x128xf32>
    %cst_8 = arith.constant dense<0.000000e+00> : vector<2xf32>
    %15 = vector.multi_reduction <add>, %14, %cst_8 [1] : vector<2x128xf32> to vector<2xf32>
    %16 = vector.shape_cast %15 : vector<2xf32> to vector<2x1xf32>
    %c0_9 = arith.constant 0 : index
    %c0_10 = arith.constant 0 : index
    %17 = vector.load %arg5[%c0_9, %c0_10] : memref<1x1xf32, #tpu.memory_space<vmem>>, vector<1x1xf32>
    %18 = vector.broadcast %17 : vector<1x1xf32> to vector<2x1xf32>
    %19 = arith.addf %16, %18 : vector<2x1xf32>
    %20 = arith.negf %19 : vector<2x1xf32>
    %21 = math.exp %20 : vector<2x1xf32>
    %cst_11 = arith.constant 1.000000e+00 : f32
    %22 = vector.broadcast %cst_11 : f32 to vector<2x1xf32>
    %23 = arith.addf %22, %21 : vector<2x1xf32>
    %24 = arith.divf %22, %23 : vector<2x1xf32>
    %c0_12 = arith.constant 0 : index
    %c0_13 = arith.constant 0 : index
    %25 = vector.load %arg6[%c0_12, %c0_13] : memref<2x1xf32, #tpu.memory_space<vmem>>, vector<2x1xf32>
    tpu.vector_store %arg6[%c0_12, %c0_13], %24 {strides = array<i32>} : memref<2x1xf32, #tpu.memory_space<vmem>>, vector<2x1xf32>,
    return
  }
  func.func @transform_0(%arg0: i32) -> (i32, i32) {
    %c0_i32 = arith.constant 0 : i32
    %c0_i32_0 = arith.constant 0 : i32
    return %arg0, %c0_i32 : i32, i32
  }
  func.func @transform_1(%arg0: i32) -> (i32, i32) {
    %c0_i32 = arith.constant 0 : i32
    %c0_i32_0 = arith.constant 0 : i32
    %c0_i32_1 = arith.constant 0 : i32
    return %c0_i32, %c0_i32_0 : i32, i32
  }
  func.func @transform_2(%arg0: i32) -> (i32, i32) {
    %c0_i32 = arith.constant 0 : i32
    %c0_i32_0 = arith.constant 0 : i32
    %c0_i32_1 = arith.constant 0 : i32
    return %c0_i32, %c0_i32_0 : i32, i32
  }
  func.func @transform_3(%arg0: i32) -> (i32, i32) {
    %c0_i32 = arith.constant 0 : i32
    %c0_i32_0 = arith.constant 0 : i32
    %c0_i32_1 = arith.constant 0 : i32
    return %c0_i32, %c0_i32_0 : i32, i32
  }
  func.func @transform_4(%arg0: i32) -> (i32, i32) {
    %c0_i32 = arith.constant 0 : i32
    %c0_i32_0 = arith.constant 0 : i32
    %c0_i32_1 = arith.constant 0 : i32
    return %c0_i32, %c0_i32_0 : i32, i32
  }
  func.func @transform_5(%arg0: i32) -> (i32, i32) {
    %c0_i32 = arith.constant 0 : i32
    %c0_i32_0 = arith.constant 0 : i32
    return %arg0, %c0_i32 : i32, i32
  }
}

</mosaic_0001>

<llo_original>
// kernel: tpu_custom_call.1
$region0: #{tpu_custom_call.1}
  #allocation0 [shape = 'u32[]', space=smem, size = 0x4, offset = 0x4, fixed_abs, tag = 'smem constant byte address 0x4 - core index']
  #allocation1 [shape = 'u32[72,128]{1,0:T(1,128)}', space=vmem, size = 0x9000, scoped, tag = 'internal scratch']
  #allocation2 [shape = 'f32[1,1]{1,0:T(1,128)S(1)}', space=vmem, size = 0x200, scoped, tag = 'scoped memory for tpu_custom_call.1']
  %s0 = inlined_call_operand.hbm [shape: f32[2,576], index: 0, kind: input, shape index: {}]
  %s1 = inlined_call_operand.hbm [shape: bf16[576,128], index: 1, kind: input, shape index: {}]
  %s2 = inlined_call_operand.vmem [shape: f32[1,128], index: 2, kind: input, shape index: {}]
  %s3 = inlined_call_operand.vmem [shape: f32[1,128], index: 3, kind: input, shape index: {}]
  %s4 = inlined_call_operand.<no memory space> [shape: f32[1,1], index: 4, kind: input, shape index: {}]
  %s5 = inlined_call_operand.vmem [shape: f32[2,1], index: 5, kind: output, shape index: {}]
  %s6 = sld [smem:[#allocation0]]
  $region38: #{tpu_custom_call.1} parent=0
    _
  %s8 = ssub.s32 1, %s6
  %s9 = scalar_select 0, %s8, %s6
  %v10 = vstv %s4
  %11 = vst [vmem:[#allocation2] sm:$0x1] %v10
  $region1: #{tpu_custom_call.1} parent=0
    #allocation3 [shape = 'u8[5120]{0}', space=vmem, size = 0x1400, scoped, tag = 'input window, operand 0, single buffered']
    #allocation4 [shape = 's32[1]{0}', space=sflag, size = 0x4, scoped, tag = 'scoped memory for tpu_custom_call.1']
    #allocation5 [shape = 'u8[147456]{0}', space=vmem, size = 0x24000, scoped, tag = 'input window, operand 1, single buffered']
    #allocation6 [shape = 's32[1]{0}', space=sflag, size = 0x4, scoped, tag = 'scoped memory for tpu_custom_call.1']
    %12 = vsyncpa [#allocation4], 0
    %13 = vsyncpa [#allocation6], 0
    // Predicated region
    $region2: #{tpu_custom_call.1} parent=1 // pred_check
      _
    $region3: #{tpu_custom_call.1} parent=1 // pred_check_branch
      %15 = sbr.rel (0) target = $region5
    $region4: #{tpu_custom_call.1} parent=1 // pred_region
      %17 = vsyncadd [#allocation4], 0
      %s19 = sshll.u32 %s0, 4
      %s20 = int_to_ptr.hbm [resolvable:$true] %s19
      %s21 = sshll.u32 [#allocation3], 4
      %s22 = int_to_ptr.vmem [resolvable:$true] %s21
      %24 = dma.hbm_to_vmem [thread:$0]  %s20, 160, %s22, [#allocation4]
    $region5: #{tpu_custom_call.1} parent=1 // pred_fallthru
      _
    // Predicated region
    $region6: #{tpu_custom_call.1} parent=1 // pred_check
      _
    $region7: #{tpu_custom_call.1} parent=1 // pred_check_branch
      %26 = sbr.rel (0) target = $region9
    $region8: #{tpu_custom_call.1} parent=1 // pred_region
      %28 = vsyncadd [#allocation6], 0
      %s29 = sshll.u32 %s1, 4
      %s30 = int_to_ptr.hbm [resolvable:$true] %s29
      %s31 = sshll.u32 [#allocation5], 4
      %s32 = int_to_ptr.vmem [resolvable:$true] %s31
      %37 = dma.hbm_to_vmem [thread:$0]  %s30, 4608, %s32, [#allocation6], 64, 64, 4
    $region9: #{tpu_custom_call.1} parent=1 // pred_fallthru
      _
    // Predicated region
    $region10: #{tpu_custom_call.1} parent=1 // pred_check
      _
    $region11: #{tpu_custom_call.1} parent=1 // pred_check_branch
      %39 = sbr.rel (0) target = $region13
    $region12: #{tpu_custom_call.1} parent=1 // pred_region
      _
    $region13: #{tpu_custom_call.1} parent=1 // pred_fallthru
      _
    // Predicated region
    $region14: #{tpu_custom_call.1} parent=1 // pred_check
      _
    $region15: #{tpu_custom_call.1} parent=1 // pred_check_branch
      %41 = sbr.rel (0) target = $region17
    $region16: #{tpu_custom_call.1} parent=1 // pred_region
      _
    $region17: #{tpu_custom_call.1} parent=1 // pred_fallthru
      _
    // Predicated region
    $region18: #{tpu_custom_call.1} parent=1 // pred_check
      _
    $region19: #{tpu_custom_call.1} parent=1 // pred_check_branch
      %43 = sbr.rel (0) target = $region21
    $region20: #{tpu_custom_call.1} parent=1 // pred_region
      _
    $region21: #{tpu_custom_call.1} parent=1 // pred_fallthru
      _
    // Predicated region
    $region22: #{tpu_custom_call.1} parent=1 // pred_check
      _
    $region23: #{tpu_custom_call.1} parent=1 // pred_check_branch
      %45 = sbr.rel (0) target = $region25
    $region24: #{tpu_custom_call.1} parent=1 // pred_region
      %47 = dma.done [#allocation4], 160
    $region25: #{tpu_custom_call.1} parent=1 // pred_fallthru
      _
    // Predicated region
    $region26: #{tpu_custom_call.1} parent=1 // pred_check
      _
    $region27: #{tpu_custom_call.1} parent=1 // pred_check_branch
      %49 = sbr.rel (0) target = $region29
    $region28: #{tpu_custom_call.1} parent=1 // pred_region
      %51 = dma.done [#allocation6], 4608
    $region29: #{tpu_custom_call.1} parent=1 // pred_fallthru
      _
    %v53 = vld [vmem:[#allocation3] sm:$0xff]
    %v54 = vld [vmem:[#allocation3 + $0x8] sm:$0x3]
    %57 = vst [vmem:[#allocation1] ss:$4 sm:$0xff] %v53
    %s58 = scalar_lea.vmem [#allocation1], 32
    %59 = vst [vmem:[%s58] ss:$4 sm:$0xff] %v54
    %v60 = vld.sshfl [vmem:[#allocation1] sm:$0xff pattern:$0x73625140]
    %v61 = vld.sshfl [vmem:[#allocation1 + $0x8] sm:$0xff pattern:$0x73625140]
    %v62 = vld.sshfl [vmem:[#allocation1 + $0x10] sm:$0xff pattern:$0x73625140]
    %v63 = vld.sshfl [vmem:[#allocation1 + $0x18] sm:$0xff pattern:$0x73625140]
    %v64 = vld.sshfl [vmem:[#allocation1 + $0x20] sm:$0xff pattern:$0x73625140]
    %v70 = vpack.c.bf16 %v60, %v60
    %v71 = vpack.c.bf16 %v61, %v61
    %v72 = vpack.c.bf16 %v62, %v62
    %v73 = vpack.c.bf16 %v63, %v63
    %v74 = vpack.c.bf16 %v64, %v64
    %v75 = vld [vmem:[#allocation5] sm:$0xf]
    %v76 = vld [vmem:[#allocation5 + $0x4] sm:$0xf]
    %v77 = vld [vmem:[#allocation5 + $0x8] sm:$0xf]
    %v78 = vld [vmem:[#allocation5 + $0xc] sm:$0xf]
    %v79 = vld [vmem:[#allocation5 + $0x10] sm:$0xf]
    %v80 = vld [vmem:[#allocation5 + $0x14] sm:$0xf]
    %v81 = vld [vmem:[#allocation5 + $0x18] sm:$0xf]
    %v82 = vld [vmem:[#allocation5 + $0x1c] sm:$0xf]
    %v83 = vld [vmem:[#allocation5 + $0x20] sm:$0xf]
    %v84 = vld [vmem:[#allocation5 + $0x24] sm:$0xf]
    %v85 = vld [vmem:[#allocation5 + $0x28] sm:$0xf]
    %v86 = vld [vmem:[#allocation5 + $0x2c] sm:$0xf]
    %v87 = vld [vmem:[#allocation5 + $0x30] sm:$0xf]
    %v88 = vld [vmem:[#allocation5 + $0x34] sm:$0xf]
    %v89 = vld [vmem:[#allocation5 + $0x38] sm:$0xf]
    %v90 = vld [vmem:[#allocation5 + $0x3c] sm:$0xf]
    %v91 = vld [vmem:[#allocation5 + $0x40] sm:$0xf]
    %v92 = vld [vmem:[#allocation5 + $0x44] sm:$0xf]
    %v93 = vld [vmem:[#allocation5 + $0x48] sm:$0xf]
    %v94 = vld [vmem:[#allocation5 + $0x4c] sm:$0xf]
    %v95 = vld [vmem:[#allocation5 + $0x50] sm:$0xf]
    %v96 = vld [vmem:[#allocation5 + $0x54] sm:$0xf]
    %v97 = vld [vmem:[#allocation5 + $0x58] sm:$0xf]
    %v98 = vld [vmem:[#allocation5 + $0x5c] sm:$0xf]
    %v99 = vld [vmem:[#allocation5 + $0x60] sm:$0xf]
    %v100 = vld [vmem:[#allocation5 + $0x64] sm:$0xf]
    %v101 = vld [vmem:[#allocation5 + $0x68] sm:$0xf]
    %v102 = vld [vmem:[#allocation5 + $0x6c] sm:$0xf]
    %v103 = vld [vmem:[#allocation5 + $0x70] sm:$0xf]
    %v104 = vld [vmem:[#allocation5 + $0x74] sm:$0xf]
    %v105 = vld [vmem:[#allocation5 + $0x78] sm:$0xf]
    %v106 = vld [vmem:[#allocation5 + $0x7c] sm:$0xf]
    %v107 = vld [vmem:[#allocation5 + $0x80] sm:$0xf]
    %v108 = vld [vmem:[#allocation5 + $0x84] sm:$0xf]
    %v109 = vld [vmem:[#allocation5 + $0x88] sm:$0xf]
    %v110 = vld [vmem:[#allocation5 + $0x8c] sm:$0xf]
    %v111 = vld [vmem:[#allocation5 + $0x90] sm:$0xf]
    %v112 = vld [vmem:[#allocation5 + $0x94] sm:$0xf]
    %v113 = vld [vmem:[#allocation5 + $0x98] sm:$0xf]
    %v114 = vld [vmem:[#allocation5 + $0x9c] sm:$0xf]
    %v115 = vld [vmem:[#allocation5 + $0xa0] sm:$0xf]
    %v116 = vld [vmem:[#allocation5 + $0xa4] sm:$0xf]
    %v117 = vld [vmem:[#allocation5 + $0xa8] sm:$0xf]
    %v118 = vld [vmem:[#allocation5 + $0xac] sm:$0xf]
    %v119 = vld [vmem:[#allocation5 + $0xb0] sm:$0xf]
    %v120 = vld [vmem:[#allocation5 + $0xb4] sm:$0xf]
    %v121 = vld [vmem:[#allocation5 + $0xb8] sm:$0xf]
    %v122 = vld [vmem:[#allocation5 + $0xbc] sm:$0xf]
    %v123 = vld [vmem:[#allocation5 + $0xc0] sm:$0xf]
    %v124 = vld [vmem:[#allocation5 + $0xc4] sm:$0xf]
    %v125 = vld [vmem:[#allocation5 + $0xc8] sm:$0xf]
    %v126 = vld [vmem:[#allocation5 + $0xcc] sm:$0xf]
    %v127 = vld [vmem:[#allocation5 + $0xd0] sm:$0xf]
    %v128 = vld [vmem:[#allocation5 + $0xd4] sm:$0xf]
    %v129 = vld [vmem:[#allocation5 + $0xd8] sm:$0xf]
    %v130 = vld [vmem:[#allocation5 + $0xdc] sm:$0xf]
    %v131 = vld [vmem:[#allocation5 + $0xe0] sm:$0xf]
    %v132 = vld [vmem:[#allocation5 + $0xe4] sm:$0xf]
    %v133 = vld [vmem:[#allocation5 + $0xe8] sm:$0xf]
    %v134 = vld [vmem:[#allocation5 + $0xec] sm:$0xf]
    %v135 = vld [vmem:[#allocation5 + $0xf0] sm:$0xf]
    %v136 = vld [vmem:[#allocation5 + $0xf4] sm:$0xf]
    %v137 = vld [vmem:[#allocation5 + $0xf8] sm:$0xf]
    %v138 = vld [vmem:[#allocation5 + $0xfc] sm:$0xf]
    %v139 = vld [vmem:[#allocation5 + $0x100] sm:$0xf]
    %v140 = vld [vmem:[#allocation5 + $0x104] sm:$0xf]
    %v141 = vld [vmem:[#allocation5 + $0x108] sm:$0xf]
    %v142 = vld [vmem:[#allocation5 + $0x10c] sm:$0xf]
    %v143 = vld [vmem:[#allocation5 + $0x110] sm:$0xf]
    %v144 = vld [vmem:[#allocation5 + $0x114] sm:$0xf]
    %v145 = vld [vmem:[#allocation5 + $0x118] sm:$0xf]
    %v146 = vld [vmem:[#allocation5 + $0x11c] sm:$0xf]
    %v147 = vld [vmem:[%s2] sm:$0x1]
    %v149 = vperm.slane %v147, 0
    %v223 = vunpack.c.l.b16 %v75
    %v224 = vunpack.c.l.b16 %v76
    %v225 = vunpack.c.l.b16 %v77
    %v226 = vunpack.c.l.b16 %v78
    %v227 = vunpack.c.l.b16 %v79
    %v228 = vunpack.c.l.b16 %v80
    %v229 = vunpack.c.l.b16 %v81
    %v230 = vunpack.c.l.b16 %v82
    %v231 = vunpack.c.l.b16 %v83
    %v232 = vunpack.c.l.b16 %v84
    %v233 = vunpack.c.l.b16 %v85
    %v234 = vunpack.c.l.b16 %v86
    %v235 = vunpack.c.l.b16 %v87
    %v236 = vunpack.c.l.b16 %v88
    %v237 = vunpack.c.l.b16 %v89
    %v238 = vunpack.c.l.b16 %v90
    %v239 = vunpack.c.l.b16 %v91
    %v240 = vunpack.c.l.b16 %v92
    %v241 = vunpack.c.l.b16 %v93
    %v242 = vunpack.c.l.b16 %v94
    %v243 = vunpack.c.l.b16 %v95
    %v244 = vunpack.c.l.b16 %v96
    %v245 = vunpack.c.l.b16 %v97
    %v246 = vunpack.c.l.b16 %v98
    %v247 = vunpack.c.l.b16 %v99
    %v248 = vunpack.c.l.b16 %v100
    %v249 = vunpack.c.l.b16 %v101
    %v250 = vunpack.c.l.b16 %v102
    %v251 = vunpack.c.l.b16 %v103
    %v252 = vunpack.c.l.b16 %v104
    %v253 = vunpack.c.l.b16 %v105
    %v254 = vunpack.c.l.b16 %v106
    %v255 = vunpack.c.l.b16 %v107
    %v256 = vunpack.c.l.b16 %v108
    %v257 = vunpack.c.l.b16 %v109
    %v258 = vunpack.c.l.b16 %v110
    %v259 = vunpack.c.l.b16 %v111
    %v260 = vunpack.c.l.b16 %v112
    %v261 = vunpack.c.l.b16 %v113
    %v262 = vunpack.c.l.b16 %v114
    %v263 = vunpack.c.l.b16 %v115
    %v264 = vunpack.c.l.b16 %v116
    %v265 = vunpack.c.l.b16 %v117
    %v266 = vunpack.c.l.b16 %v118
    %v267 = vunpack.c.l.b16 %v119
    %v268 = vunpack.c.l.b16 %v120
    %v269 = vunpack.c.l.b16 %v121
    %v270 = vunpack.c.l.b16 %v122
    %v271 = vunpack.c.l.b16 %v123
    %v272 = vunpack.c.l.b16 %v124
    %v273 = vunpack.c.l.b16 %v125
    %v274 = vunpack.c.l.b16 %v126
    %v275 = vunpack.c.l.b16 %v127
    %v276 = vunpack.c.l.b16 %v128
    %v277 = vunpack.c.l.b16 %v129
    %v278 = vunpack.c.l.b16 %v130
    %v279 = vunpack.c.l.b16 %v131
    %v280 = vunpack.c.l.b16 %v132
    %v281 = vunpack.c.l.b16 %v133
    %v282 = vunpack.c.l.b16 %v134
    %v283 = vunpack.c.l.b16 %v135
    %v284 = vunpack.c.l.b16 %v136
    %v285 = vunpack.c.l.b16 %v137
    %v286 = vunpack.c.l.b16 %v138
    %v287 = vunpack.c.l.b16 %v139
    %v288 = vunpack.c.l.b16 %v140
    %v289 = vunpack.c.l.b16 %v141
    %v290 = vunpack.c.l.b16 %v142
    %v291 = vunpack.c.l.b16 %v143
    %v292 = vunpack.c.l.b16 %v144
    %v293 = vunpack.c.l.b16 %v145
    %v294 = vunpack.c.l.b16 %v146
    %v295 = vpack.c.b16 %v224, %v223
    %v296 = vpack.c.b16 %v226, %v225
    %v297 = vpack.c.b16 %v228, %v227
    %v298 = vpack.c.b16 %v230, %v229
    %v299 = vpack.c.b16 %v232, %v231
    %v300 = vpack.c.b16 %v234, %v233
    %v301 = vpack.c.b16 %v236, %v235
    %v302 = vpack.c.b16 %v238, %v237
    %v303 = vpack.c.b16 %v240, %v239
    %v304 = vpack.c.b16 %v242, %v241
    %v305 = vpack.c.b16 %v244, %v243
    %v306 = vpack.c.b16 %v246, %v245
    %v307 = vpack.c.b16 %v248, %v247
    %v308 = vpack.c.b16 %v250, %v249
    %v309 = vpack.c.b16 %v252, %v251
    %v310 = vpack.c.b16 %v254, %v253
    %v311 = vpack.c.b16 %v256, %v255
    %v312 = vpack.c.b16 %v258, %v257
    %v313 = vpack.c.b16 %v260, %v259
    %v314 = vpack.c.b16 %v262, %v261
    %v315 = vpack.c.b16 %v264, %v263
    %v316 = vpack.c.b16 %v266, %v265
    %v317 = vpack.c.b16 %v268, %v267
    %v318 = vpack.c.b16 %v270, %v269
    %v319 = vpack.c.b16 %v272, %v271
    %v320 = vpack.c.b16 %v274, %v273
    %v321 = vpack.c.b16 %v276, %v275
    %v322 = vpack.c.b16 %v278, %v277
    %v323 = vpack.c.b16 %v280, %v279
    %v324 = vpack.c.b16 %v282, %v281
    %v325 = vpack.c.b16 %v284, %v283
    %v326 = vpack.c.b16 %v286, %v285
    %v327 = vpack.c.b16 %v288, %v287
    %v328 = vpack.c.b16 %v290, %v289
    %v329 = vpack.c.b16 %v292, %v291
    %v330 = vpack.c.b16 %v294, %v293
    %vm367 = vcmask 523264
    %v369 = vsel %vm367, %v74, 0
    %371 = vmatpush.bf16.msra.mxu0 %v302
    %372 = vmatpush.bf16.msra.mxu0 %v301
    %373 = vmatpush.bf16.msra.mxu0 %v300
    %374 = vmatpush.bf16.msra.mxu0 %v299
    %375 = vmatpush.bf16.msra.mxu0 %v298
    %376 = vmatpush.bf16.msra.mxu0 %v297
    %377 = vmatpush.bf16.msra.mxu0 %v296
    %378 = vmatpush.bf16.msra.mxu0 %v295
    %379 = vmatmul.bf16.gmra.mxu0 %v70
    %v380 = vpop.f32.mrf.mxu0
    %v381 = vadd.f32 %v149, %v380
    %v382 = vpop.f32.mrf.mxu0
    %383 = vdwg.mxu0
    %384 = vmatpush.bf16.msra.mxu0 %v310
    %385 = vmatpush.bf16.msra.mxu0 %v309
    %386 = vmatpush.bf16.msra.mxu0 %v308
    %387 = vmatpush.bf16.msra.mxu0 %v307
    %388 = vmatpush.bf16.msra.mxu0 %v306
    %389 = vmatpush.bf16.msra.mxu0 %v305
    %390 = vmatpush.bf16.msra.mxu0 %v304
    %391 = vmatpush.bf16.msra.mxu0 %v303
    %392 = vmatmul.bf16.gmra.mxu0 %v71
    %v393 = vpop.f32.mrf.mxu0
    %v394 = vadd.f32 %v381, %v393
    %v395 = vpop.f32.mrf.mxu0
    %396 = vdwg.mxu0
    %397 = vmatpush.bf16.msra.mxu0 %v318
    %398 = vmatpush.bf16.msra.mxu0 %v317
    %399 = vmatpush.bf16.msra.mxu0 %v316
    %400 = vmatpush.bf16.msra.mxu0 %v315
    %401 = vmatpush.bf16.msra.mxu0 %v314
    %402 = vmatpush.bf16.msra.mxu0 %v313
    %403 = vmatpush.bf16.msra.mxu0 %v312
    %404 = vmatpush.bf16.msra.mxu0 %v311
    %405 = vmatmul.bf16.gmra.mxu0 %v72
    %v406 = vpop.f32.mrf.mxu0
    %v407 = vadd.f32 %v394, %v406
    %v408 = vpop.f32.mrf.mxu0
    %409 = vdwg.mxu0
    %410 = vmatpush.bf16.msra.mxu0 %v326
    %411 = vmatpush.bf16.msra.mxu0 %v325
    %412 = vmatpush.bf16.msra.mxu0 %v324
    %413 = vmatpush.bf16.msra.mxu0 %v323
    %414 = vmatpush.bf16.msra.mxu0 %v322
    %415 = vmatpush.bf16.msra.mxu0 %v321
    %416 = vmatpush.bf16.msra.mxu0 %v320
    %417 = vmatpush.bf16.msra.mxu0 %v319
    %418 = vmatmul.bf16.gmra.mxu0 %v73
    %v419 = vpop.f32.mrf.mxu0
    %v420 = vadd.f32 %v407, %v419
    %v421 = vpop.f32.mrf.mxu0
    %422 = vdwg.mxu0
    %423 = vmatpush.bf16.msra.mxu0 0
    %424 = vmatpush.bf16.msra.mxu0 0
    %425 = vmatpush.bf16.msra.mxu0 0
    %426 = vmatpush.bf16.msra.mxu0 0
    %427 = vmatpush.bf16.msra.mxu0 %v330
    %428 = vmatpush.bf16.msra.mxu0 %v329
    %429 = vmatpush.bf16.msra.mxu0 %v328
    %430 = vmatpush.bf16.msra.mxu0 %v327
    %431 = vmatmul.bf16.gmra.mxu0 %v369
    %v432 = vpop.f32.mrf.mxu0
    %v433 = vadd.f32 %v420, %v432
    %v434 = vpop.f32.mrf.mxu0
    %435 = vdwg.mxu0
    %v436 = vxor.u32 %v433, 2147483648
    %v437 = vmul.f32 %v436, 1.442695
    %v438 = vpow.pop %v437
    %v439 = vadd.f32 %v438, 1.0
    %v440 = vrcp.pop %v439
    %v441 = vmul.f32 %v439, %v440
    %v442 = vsub.f32 1.0, %v441
    %v443 = vmul.f32 %v440, %v442
    %v444 = vadd.f32 %v440, %v443
    %vm445 = vweird.f32 %v439
    %vm446 = vweird.f32 %v440
    %vm447 = vmor %vm445, %vm446
    %v448 = vsel %vm447, %v440, %v444
    %v449 = vand.u32 2147483647, %v439
    %vm450 = vcmp.eq.f32.partialorder %v449, 8.507059e+37
    %v451 = vand.u32 %v439, 2147483648
    %v452 = vor.u32 1.1754944e-38, %v451
    %v453 = vsel %vm450, %v452, %v448
    %v454 = vmul.f32 1.0, %v453
    %v455 = vld [vmem:[%s3] sm:$0x1]
    %v457 = vperm.slane %v455, 0
    %v459 = vmul.f32 %v454, %v457
    %vm460 = vcmask 1041408
    %v461 = vsel %vm460, %v459, 0.0
    %462 = vadd.xlane.f32.xlu0 %v461
    %v463 = vpop.xlane.xlu0 %462
    %v464 = vld [vmem:[#allocation2] sm:$0x1]
    %v466 = vperm.slane %v464, 0
    %v468 = vadd.f32 %v463, %v466
    %v469 = vxor.u32 %v468, 2147483648
    %v470 = vmul.f32 %v469, 1.442695
    %v471 = vpow.pop %v470
    %v472 = vadd.f32 %v471, 1.0
    %v473 = vrcp.pop %v472
    %v474 = vmul.f32 %v472, %v473
    %v475 = vsub.f32 1.0, %v474
    %v476 = vmul.f32 %v473, %v475
    %v477 = vadd.f32 %v473, %v476
    %vm478 = vweird.f32 %v472
    %vm479 = vweird.f32 %v473
    %vm480 = vmor %vm478, %vm479
    %v481 = vsel %vm480, %v473, %v477
    %v482 = vand.u32 2147483647, %v472
    %vm483 = vcmp.eq.f32.partialorder %v482, 8.507059e+37
    %v484 = vand.u32 %v472, 2147483648
    %v485 = vor.u32 1.1754944e-38, %v484
    %v486 = vsel %vm483, %v485, %v481
    %v487 = vmul.f32 1.0, %v486
    %vm488 = vcmask 1024
    %489 = vst.msk [vmem:[%s5] sm:$0x3] %vm488, %v487
    // Predicated region
    $region30: #{tpu_custom_call.1} parent=1 // pred_check
      _
    $region31: #{tpu_custom_call.1} parent=1 // pred_check_branch
      %491 = sbr.rel (0) target = $region33
    $region32: #{tpu_custom_call.1} parent=1 // pred_region
      _
    $region33: #{tpu_custom_call.1} parent=1 // pred_fallthru
      _
    // Predicated region
    $region34: #{tpu_custom_call.1} parent=1 // pred_check
      _
    $region35: #{tpu_custom_call.1} parent=1 // pred_check_branch
      %493 = sbr.rel (0) target = $region37
    $region36: #{tpu_custom_call.1} parent=1 // pred_region
      _
    $region37: #{tpu_custom_call.1} parent=1 // pred_fallthru
      _
    %494 = vsyncpa [#allocation4], 1
    %495 = vsyncpa [#allocation6], 1

</llo_original>
